<compile_context>
chip_gen: v7x
topology: tpu7x:2x2x1
jax: 0.10.0
libtpu: 0.0.40
codegen_flags: <defaults>
</compile_context>

<pallas_src>
import jax
import jax.numpy as jnp
from jax.experimental import pallas as pl
from jax.experimental.pallas import tpu as pltpu


def _round_up(x: int, m: int) -> int:
    return (x + m - 1) // m * m


def _cdiv(a: int, b: int) -> int:
    return -(-a // b)


def _vmem_capacity_bytes() -> int:
    try:
        cap = getattr(pltpu.get_tpu_info(), "vmem_capacity_bytes", None)
        if cap:
            return int(cap)
    except Exception:
        pass
    return 64 * 1024 * 1024  # conservative fallback (v7x per-TensorCore VMEM)


def _choose_tiles(B: int, D: int, tile_b, vmem_cap: int):
    """Pick batch tile TB, padded batch Bp and batch-grid size from VMEM budget."""
    # Resident weights/biases (bf16 weights; budget for double-buffering).
    fixed = 2 * (2 * D * D * 2) + 2 * (2 * D * 4)
    # Per batch-row bytes that scale with TB: x (2 bufs) + out (2 bufs) +
    # 2 scratch accumulators + ~6 live f32 temporaries, all D lanes wide.
    per_row = 12 * D * 4
    budget = int(0.5 * vmem_cap) - fixed
    tb = max(budget // per_row, 8)
    tb = min(int(tb) // 8 * 8, 4096)
    if tile_b is not None:
        tb = min(tb, max(_round_up(int(tile_b), 8), 8))
    if tb >= B:
        return B, B, 1  # single full-extent batch block, no padding
    grid_b = _cdiv(B, tb)
    if grid_b > 1 and grid_b % 2 == 1:  # v7x megacore: prefer an even parallel grid
        grid_b += 1
        tb = _round_up(_cdiv(B, grid_b), 8)
    bp = grid_b * tb
    return tb, bp, grid_b


def intersection_kernel(x_ref, w1_ref, b1_ref, w2_ref, b2_ref, out_ref,
                        m_ref, den_ref):
    # x_ref : (1, TB, D) f32   w*_ref : (D, D) bf16   b*_ref : (1, D) f32
    # out_ref : (TB, D) f32 (numerator accumulator)   m_ref/den_ref : (TB, D) f32
    n = pl.program_id(1)

    @pl.when(n == 0)
    def _init():
        m_ref[...] = jnp.full(m_ref.shape, -jnp.inf, m_ref.dtype)
        den_ref[...] = jnp.zeros(den_ref.shape, den_ref.dtype)
        out_ref[...] = jnp.zeros(out_ref.shape, out_ref.dtype)

    x = x_ref[0]                                   # (TB, D) f32
    xb = x.astype(jnp.bfloat16)

    # Linear 1 + ReLU (bf16 MXU, f32 accumulate, bias folded right after the dot).
    h1 = jnp.dot(xb, w1_ref[...], preferred_element_type=jnp.float32) + b1_ref[...]
    h1 = jnp.maximum(h1, 0.0)
    # Linear 2 -> per-set logits.
    lg = jnp.dot(h1.astype(jnp.bfloat16), w2_ref[...],
                 preferred_element_type=jnp.float32) + b2_ref[...]

    # Online softmax over the set axis (grid axis 1), fused with the weighted sum.
    m_prev = m_ref[...]
    m_new = jnp.maximum(m_prev, lg)
    alpha = jnp.exp(m_prev - m_new)                # exp(-inf)=0 on the first step
    e = jnp.exp(lg - m_new)
    den_ref[...] = alpha * den_ref[...] + e
    out_ref[...] = alpha * out_ref[...] + e * x    # numerator, f32
    m_ref[...] = m_new

    @pl.when(n == pl.num_programs(1) - 1)
    def _finalize():
        # Fused normalization; approx reciprocal runs on the EUP slot.
        out_ref[...] = out_ref[...] * pl.reciprocal(den_ref[...], approx=True)


def intersection_forward(feature, w1, b1, w2, b2, *, tile_b=None):
    """feature: (N, B, D) f32. w1/w2: (D, D) in PyTorch (out, in) layout. b1/b2: (D,).

    Call under jax.jit (static_argnames=("tile_b",)) so the one-time weight
    transpose/cast and any batch-tail pad compile into the same program.
    """
    N, B, D = feature.shape
    assert w1.shape == (D, D) and w2.shape == (D, D)
    assert b1.shape == (D,) and b2.shape == (D,)

    vmem_cap = _vmem_capacity_bytes()
    TB, Bp, grid_b = _choose_tiles(B, D, tile_b, vmem_cap)

    # One-time weight prep: transpose to (in, out), bf16 for the MXU; f32 biases.
    w1t = w1.T.astype(jnp.bfloat16)
    w2t = w2.T.astype(jnp.bfloat16)
    b1r = b1.astype(jnp.float32).reshape(1, D)
    b2r = b2.astype(jnp.float32).reshape(1, D)

    x = feature.astype(jnp.float32)
    if Bp != B:
        # Only the batch tail is padded (zero rows are sliced away after the call).
        x = jnp.pad(x, ((0, 0), (0, Bp - B), (0, 0)))

    # Generation-aware VMEM request (cap well under physical for compiler scratch).
    x_block = TB * D * 4
    out_block = TB * D * 4
    w_bytes = 2 * D * D * 2 + 2 * D * 4
    scratch_bytes = 2 * TB * D * 4
    temps_bytes = 6 * TB * D * 4
    need = 2 * x_block + 2 * out_block + 2 * w_bytes + scratch_bytes + temps_bytes
    vmem_limit = int(min(max(int(1.5 * need), 16 * 1024 * 1024),
                         int(0.75 * vmem_cap)))

    cost = pl.CostEstimate(
        flops=int(2 * 2 * N * Bp * D * D),            # two (TB,D)x(D,D) matmuls / set
        transcendentals=int(2 * N * Bp * D),          # online-softmax exps
        bytes_accessed=int(N * Bp * D * 4 + Bp * D * 4 + 2 * D * D * 2 + 2 * D * 4),
    )

    out = pl.pallas_call(
        intersection_kernel,
        out_shape=jax.ShapeDtypeStruct((Bp, D), jnp.float32),
        grid=(grid_b, N),
        in_specs=[
            pl.BlockSpec((1, TB, D), lambda i, n: (n, i, 0)),   # one set/step, streamed
            pl.BlockSpec((D, D), lambda i, n: (0, 0)),          # resident bf16 weights
            pl.BlockSpec((1, D), lambda i, n: (0, 0)),
            pl.BlockSpec((D, D), lambda i, n: (0, 0)),
            pl.BlockSpec((1, D), lambda i, n: (0, 0)),
        ],
        out_specs=pl.BlockSpec((TB, D), lambda i, n: (i, 0)),   # accumulator across n
        scratch_shapes=[
            pltpu.VMEM((TB, D), jnp.float32),   # running max
            pltpu.VMEM((TB, D), jnp.float32),   # running softmax denominator
        ],
        compiler_params=pltpu.CompilerParams(
            dimension_semantics=("parallel", "arbitrary"),
            vmem_limit_bytes=vmem_limit,
        ),
        cost_estimate=cost,
    )(x, w1t, b1r, w2t, b2r)

    return out[:B] if Bp != B else out


def intersection_reference(feature, w1, b1, w2, b2):
    """Pure-JAX f32 reference mirroring the PyTorch module."""
    h1 = jax.nn.relu(jnp.einsum("nbd,ed->nbe", feature, w1) + b1)
    logits = jnp.einsum("nbd,ed->nbe", h1, w2) + b2
    attn = jax.nn.softmax(logits, axis=0)
    return jnp.sum(attn * feature, axis=0)


def xavier_uniform(key, shape):
    fan_in, fan_out = shape[1], shape[0]
    bound = jnp.sqrt(6.0 / (fan_in + fan_out))
    return jax.random.uniform(key, shape, jnp.float32, minval=-bound, maxval=bound)


if __name__ == "__main__":
    # Small shapes consistent with the module: num_sets=4, batch=18, dim=32.
    N, B, D = 4, 18, 32

    key = jax.random.PRNGKey(0)
    k_x, k_w1, k_b1, k_w2, k_b2 = jax.random.split(key, 5)

    feature = jax.random.normal(k_x, (N, B, D), jnp.float32)

    # Linear params, PyTorch layout: weight (out, in), bias (out,)
    w1 = xavier_uniform(k_w1, (D, D))
    w2 = xavier_uniform(k_w2, (D, D))
    bias_bound = 1.0 / jnp.sqrt(jnp.float32(D))
    b1 = jax.random.uniform(k_b1, (D,), jnp.float32, -bias_bound, bias_bound)
    b2 = jax.random.uniform(k_b2, (D,), jnp.float32, -bias_bound, bias_bound)

    fwd = jax.jit(intersection_forward, static_argnames=("tile_b",))
    ref = intersection_reference(feature, w1, b1, w2, b2)

    # 1) Auto tiling: single full-extent batch block (grid_b = 1, no padding).
    out_auto = jax.block_until_ready(fwd(feature, w1, b1, w2, b2))
    # 2) Forced small tile: exercises batch padding, multi-step even grid, accumulator.
    out_tiled = jax.block_until_ready(fwd(feature, w1, b1, w2, b2, tile_b=8))

    assert out_auto.shape == (B, D) and out_tiled.shape == (B, D)
    # bf16 matmul inputs + approx reciprocal loosen the tolerance vs the f32 reference.
    assert jnp.allclose(out_auto, ref, atol=2e-2, rtol=2e-2)
    assert jnp.allclose(out_tiled, ref, atol=2e-2, rtol=2e-2)

    print("KERNEL_OK")
</pallas_src>

<mosaic_0001>
module attributes {stable_mosaic.version = 11 : i64} {
  func.func @intersection_kernel(%arg0: i32, %arg1: i32, %arg2: memref<1x18x32xf32, #tpu.memory_space<vmem>>, %arg3: memref<32x32xbf16, #tpu.memory_space<vmem>>, %arg4: memref<1x32xf32, #tpu.memory_space<vmem>>, %arg5: memref<32x32xbf16, #tpu.memory_space<vmem>>, %arg6: memref<1x32xf32, #tpu.memory_space<vmem>>, %arg7: memref<18x32xf32, #tpu.memory_space<vmem>>, %arg8: memref<18x32xf32, #tpu.memory_space<vmem>>, %arg9: memref<18x32xf32, #tpu.memory_space<vmem>>) attributes {dimension_semantics = [#tpu.dimension_semantics<parallel>, #tpu.dimension_semantics<arbitrary>], iteration_bounds = array<i64: 1, 4>, scalar_prefetch = 0 : i64, scratch_operands = 2 : i64, tpu.core_type = #tpu.core_type<tc>, window_params = [{transform_indices = @transform_0, window_bounds = array<i64: 1, 18, 32>}, {pipeline_mode = #tpu.pipeline_mode<synchronous>, transform_indices = @transform_1, window_bounds = array<i64: 32, 32>}, {pipeline_mode = #tpu.pipeline_mode<synchronous>, transform_indices = @transform_2, window_bounds = array<i64: 1, 32>}, {pipeline_mode = #tpu.pipeline_mode<synchronous>, transform_indices = @transform_3, window_bounds = array<i64: 32, 32>}, {pipeline_mode = #tpu.pipeline_mode<synchronous>, transform_indices = @transform_4, window_bounds = array<i64: 1, 32>}, {transform_indices = @transform_5, window_bounds = array<i64: 18, 32>}]} {
    %c0_i32 = arith.constant 0 : i32
    %0 = arith.cmpi eq, %arg1, %c0_i32 : i32
    %1 = arith.extui %0 : i1 to i32
    %c0_i32_0 = arith.constant 0 : i32
    %2 = arith.cmpi ne, %1, %c0_i32_0 : i32
    scf.if %2 {
      %cst_26 = arith.constant 0xFF800000 : f32
      %38 = vector.broadcast %cst_26 : f32 to vector<18x32xf32>
      %c0_27 = arith.constant 0 : index
      %c0_28 = arith.constant 0 : index
      %39 = vector.load %arg8[%c0_27, %c0_28] : memref<18x32xf32, #tpu.memory_space<vmem>>, vector<18x32xf32>
      tpu.vector_store %arg8[%c0_27, %c0_28], %38 {strides = array<i32>} : memref<18x32xf32, #tpu.memory_space<vmem>>, vector<18x32xf32>,
      %cst_29 = arith.constant 0.000000e+00 : f32
      %40 = vector.broadcast %cst_29 : f32 to vector<18x32xf32>
      %c0_30 = arith.constant 0 : index
      %c0_31 = arith.constant 0 : index
      %41 = vector.load %arg9[%c0_30, %c0_31] : memref<18x32xf32, #tpu.memory_space<vmem>>, vector<18x32xf32>
      tpu.vector_store %arg9[%c0_30, %c0_31], %40 {strides = array<i32>} : memref<18x32xf32, #tpu.memory_space<vmem>>, vector<18x32xf32>,
      %cst_32 = arith.constant 0.000000e+00 : f32
      %42 = vector.broadcast %cst_32 : f32 to vector<18x32xf32>
      %c0_33 = arith.constant 0 : index
      %c0_34 = arith.constant 0 : index
      %43 = vector.load %arg7[%c0_33, %c0_34] : memref<18x32xf32, #tpu.memory_space<vmem>>, vector<18x32xf32>
      tpu.vector_store %arg7[%c0_33, %c0_34], %42 {strides = array<i32>} : memref<18x32xf32, #tpu.memory_space<vmem>>, vector<18x32xf32>,
    } else {
    }
    %c0 = arith.constant 0 : index
    %c0_1 = arith.constant 0 : index
    %c0_2 = arith.constant 0 : index
    %3 = vector.load %arg2[%c0, %c0_1, %c0_2] : memref<1x18x32xf32, #tpu.memory_space<vmem>>, vector<1x18x32xf32>
    %4 = vector.shape_cast %3 : vector<1x18x32xf32> to vector<18x32xf32>
    %5 = arith.truncf %4 : vector<18x32xf32> to vector<18x32xbf16>
    %c0_3 = arith.constant 0 : index
    %c0_4 = arith.constant 0 : index
    %6 = vector.load %arg3[%c0_3, %c0_4] : memref<32x32xbf16, #tpu.memory_space<vmem>>, vector<32x32xbf16>
    %cst = arith.constant dense<0.000000e+00> : vector<18x32xf32>
    %7 = tpu.matmul %5, %6, %cst {dimension_numbers = #tpu.dot_dimension_numbers<[1], [0], [0], [1], [0, 0, 1, 1], [], []>} : vector<18x32xbf16>, vector<32x32xbf16>, vector<18x32xf32> -> vector<18x32xf32>
    %c0_5 = arith.constant 0 : index
    %c0_6 = arith.constant 0 : index
    %8 = vector.load %arg4[%c0_5, %c0_6] : memref<1x32xf32, #tpu.memory_space<vmem>>, vector<1x32xf32>
    %9 = vector.broadcast %8 : vector<1x32xf32> to vector<18x32xf32>
    %10 = arith.addf %7, %9 : vector<18x32xf32>
    %cst_7 = arith.constant 0.000000e+00 : f32
    %11 = vector.broadcast %cst_7 : f32 to vector<18x32xf32>
    %12 = arith.maximumf %10, %11 : vector<18x32xf32>
    %13 = arith.truncf %12 : vector<18x32xf32> to vector<18x32xbf16>
    %c0_8 = arith.constant 0 : index
    %c0_9 = arith.constant 0 : index
    %14 = vector.load %arg5[%c0_8, %c0_9] : memref<32x32xbf16, #tpu.memory_space<vmem>>, vector<32x32xbf16>
    %cst_10 = arith.constant dense<0.000000e+00> : vector<18x32xf32>
    %15 = tpu.matmul %13, %14, %cst_10 {dimension_numbers = #tpu.dot_dimension_numbers<[1], [0], [0], [1], [0, 0, 1, 1], [], []>} : vector<18x32xbf16>, vector<32x32xbf16>, vector<18x32xf32> -> vector<18x32xf32>
    %c0_11 = arith.constant 0 : index
    %c0_12 = arith.constant 0 : index
    %16 = vector.load %arg6[%c0_11, %c0_12] : memref<1x32xf32, #tpu.memory_space<vmem>>, vector<1x32xf32>
    %17 = vector.broadcast %16 : vector<1x32xf32> to vector<18x32xf32>
    %18 = arith.addf %15, %17 : vector<18x32xf32>
    %c0_13 = arith.constant 0 : index
    %c0_14 = arith.constant 0 : index
    %19 = vector.load %arg8[%c0_13, %c0_14] : memref<18x32xf32, #tpu.memory_space<vmem>>, vector<18x32xf32>
    %20 = arith.maximumf %19, %18 : vector<18x32xf32>
    %21 = arith.subf %19, %20 : vector<18x32xf32>
    %22 = math.exp %21 : vector<18x32xf32>
    %23 = arith.subf %18, %20 : vector<18x32xf32>
    %24 = math.exp %23 : vector<18x32xf32>
    %c0_15 = arith.constant 0 : index
    %c0_16 = arith.constant 0 : index
    %25 = vector.load %arg9[%c0_15, %c0_16] : memref<18x32xf32, #tpu.memory_space<vmem>>, vector<18x32xf32>
    %26 = arith.mulf %22, %25 : vector<18x32xf32>
    %27 = arith.addf %26, %24 : vector<18x32xf32>
    %c0_17 = arith.constant 0 : index
    %c0_18 = arith.constant 0 : index
    %28 = vector.load %arg9[%c0_17, %c0_18] : memref<18x32xf32, #tpu.memory_space<vmem>>, vector<18x32xf32>
    tpu.vector_store %arg9[%c0_17, %c0_18], %27 {strides = array<i32>} : memref<18x32xf32, #tpu.memory_space<vmem>>, vector<18x32xf32>,
    %c0_19 = arith.constant 0 : index
    %c0_20 = arith.constant 0 : index
    %29 = vector.load %arg7[%c0_19, %c0_20] : memref<18x32xf32, #tpu.memory_space<vmem>>, vector<18x32xf32>
    %30 = arith.mulf %22, %29 : vector<18x32xf32>
    %31 = arith.mulf %24, %4 : vector<18x32xf32>
    %32 = arith.addf %30, %31 : vector<18x32xf32>
    %c0_21 = arith.constant 0 : index
    %c0_22 = arith.constant 0 : index
    %33 = vector.load %arg7[%c0_21, %c0_22] : memref<18x32xf32, #tpu.memory_space<vmem>>, vector<18x32xf32>
    tpu.vector_store %arg7[%c0_21, %c0_22], %32 {strides = array<i32>} : memref<18x32xf32, #tpu.memory_space<vmem>>, vector<18x32xf32>,
    %c0_23 = arith.constant 0 : index
    %c0_24 = arith.constant 0 : index
    %34 = vector.load %arg8[%c0_23, %c0_24] : memref<18x32xf32, #tpu.memory_space<vmem>>, vector<18x32xf32>
    tpu.vector_store %arg8[%c0_23, %c0_24], %20 {strides = array<i32>} : memref<18x32xf32, #tpu.memory_space<vmem>>, vector<18x32xf32>,
    %c3_i32 = arith.constant 3 : i32
    %35 = arith.cmpi eq, %arg1, %c3_i32 : i32
    %36 = arith.extui %35 : i1 to i32
    %c0_i32_25 = arith.constant 0 : i32
    %37 = arith.cmpi ne, %36, %c0_i32_25 : i32
    scf.if %37 {
      %c0_26 = arith.constant 0 : index
      %c0_27 = arith.constant 0 : index
      %38 = vector.load %arg7[%c0_26, %c0_27] : memref<18x32xf32, #tpu.memory_space<vmem>>, vector<18x32xf32>
      %c0_28 = arith.constant 0 : index
      %c0_29 = arith.constant 0 : index
      %39 = vector.load %arg9[%c0_28, %c0_29] : memref<18x32xf32, #tpu.memory_space<vmem>>, vector<18x32xf32>
      %40 = tpu.reciprocal %39 {approx = true} : vector<18x32xf32> -> vector<18x32xf32>
      %41 = arith.mulf %38, %40 : vector<18x32xf32>
      %c0_30 = arith.constant 0 : index
      %c0_31 = arith.constant 0 : index
      %42 = vector.load %arg7[%c0_30, %c0_31] : memref<18x32xf32, #tpu.memory_space<vmem>>, vector<18x32xf32>
      tpu.vector_store %arg7[%c0_30, %c0_31], %41 {strides = array<i32>} : memref<18x32xf32, #tpu.memory_space<vmem>>, vector<18x32xf32>,
    } else {
    }
    return
  }
  func.func @transform_0(%arg0: i32, %arg1: i32) -> (i32, i32, i32) {
    %c0_i32 = arith.constant 0 : i32
    %c0_i32_0 = arith.constant 0 : i32
    return %arg1, %arg0, %c0_i32 : i32, i32, i32
  }
  func.func @transform_1(%arg0: i32, %arg1: i32) -> (i32, i32) {
    %c0_i32 = arith.constant 0 : i32
    %c0_i32_0 = arith.constant 0 : i32
    %c0_i32_1 = arith.constant 0 : i32
    return %c0_i32, %c0_i32_0 : i32, i32
  }
  func.func @transform_2(%arg0: i32, %arg1: i32) -> (i32, i32) {
    %c0_i32 = arith.constant 0 : i32
    %c0_i32_0 = arith.constant 0 : i32
    %c0_i32_1 = arith.constant 0 : i32
    return %c0_i32, %c0_i32_0 : i32, i32
  }
  func.func @transform_3(%arg0: i32, %arg1: i32) -> (i32, i32) {
    %c0_i32 = arith.constant 0 : i32
    %c0_i32_0 = arith.constant 0 : i32
    %c0_i32_1 = arith.constant 0 : i32
    return %c0_i32, %c0_i32_0 : i32, i32
  }
  func.func @transform_4(%arg0: i32, %arg1: i32) -> (i32, i32) {
    %c0_i32 = arith.constant 0 : i32
    %c0_i32_0 = arith.constant 0 : i32
    %c0_i32_1 = arith.constant 0 : i32
    return %c0_i32, %c0_i32_0 : i32, i32
  }
  func.func @transform_5(%arg0: i32, %arg1: i32) -> (i32, i32) {
    %c0_i32 = arith.constant 0 : i32
    %c0_i32_0 = arith.constant 0 : i32
    return %arg0, %c0_i32 : i32, i32
  }
}

</mosaic_0001>

<llo_original>
// kernel: intersection_forward.1
$region0: #{intersection_forward.1}
  #allocation0 [shape = 'u32[]', space=smem, size = 0x4, offset = 0x4, fixed_abs, tag = 'smem constant byte address 0x4 - core index']
  #allocation1 [shape = 'u32[144,128]{1,0:T(1,128)}', space=vmem, size = 0x12000, scoped, tag = 'internal scratch']
  #allocation2 [shape = 'f32[18,32]{1,0:T(8,128)}', space=vmem, size = 0x3000, scoped, tag = 'scratch operand']
  #allocation3 [shape = 'f32[18,32]{1,0:T(8,128)}', space=vmem, size = 0x3000, scoped, tag = 'scratch operand']
  %s0 = inlined_call_operand.vmem [shape: f32[4,18,32], index: 0, kind: input, shape index: {}]
  %s1 = inlined_call_operand.vmem [shape: bf16[32,32], index: 1, kind: input, shape index: {}]
  %s2 = inlined_call_operand.vmem [shape: f32[1,32], index: 2, kind: input, shape index: {}]
  %s3 = inlined_call_operand.vmem [shape: bf16[32,32], index: 3, kind: input, shape index: {}]
  %s4 = inlined_call_operand.vmem [shape: f32[1,32], index: 4, kind: input, shape index: {}]
  %s5 = inlined_call_operand.hbm [shape: f32[18,32], index: 5, kind: output, shape index: {}]
  %s6 = sld [smem:[#allocation0]]
  $region61: #{intersection_forward.1} parent=0
    _
  %s8 = ssub.s32 1, %s6
  %s9 = scalar_select 0, %s8, %s6
  $region1: #{intersection_forward.1} parent=0
    #allocation4 [shape = 'u8[12288]{0}', space=vmem, size = 0x3000, scoped, tag = 'output window, operand 0, single buffered']
    #allocation5 [shape = 's32[2]{0}', space=sflag, size = 0x8, scoped, tag = 'scoped memory for intersection_forward.1']
    %10 = vsyncpa [#allocation5], 0
    loop: start=0, step=1, limit=6
    $region2: #{intersection_forward.1} parent=1 // loop_pre_header
      _
    $region3: #{intersection_forward.1} parent=1 // loop_header
      %s12 = sphi 0, %s16
      %p13 = scmp.ge.s32.totalorder %s12, 6
      %s19 = sphi 0, %s31
      %s20 = sphi 0, %s27
      %s21 = sphi 0, %s19
      %s22 = sphi 0, %s20
      %s23 = sphi 0, %s21
      %s24 = sphi 0, %s22
      %s36 = sphi 0, %s38
      %s39 = sphi 0, %s36
      %s40 = sphi 0, %s39
      %s56 = sphi 0, %s40
      %s60 = sphi 0, %s60
      %s62 = sphi 0, %s60
      %s63 = sphi 0, %s62
      %s77 = sphi 0, %s63
      %s81 = sphi 0, %s81
      %s83 = sphi 0, %s81
      %s84 = sphi 0, %s83
      %s98 = sphi 0, %s84
      %s102 = sphi 0, %s102
      %s104 = sphi 0, %s102
      %s105 = sphi 0, %s104
      %s119 = sphi 0, %s105
      %s123 = sphi 0, %s123
      %s125 = sphi 0, %s123
      %s126 = sphi 0, %s125
      %s140 = sphi 0, %s126
      %s146 = sphi 0, %s148
      %s149 = sphi 0, %s146
      %s150 = sphi 0, %s149
      %s166 = sphi 0, %s150
    $region4: #{intersection_forward.1} parent=1 // loop_header_branch
      %15 = sbr.rel (%p13) target = $region8
    $region5: #{intersection_forward.1} parent=1 // loop_body
      %s17 = ssub.s32 %s12, 1
      %s18 = ssub.s32 %s12, 2
      %s25 = sadd.s32 1, %s20
      %p26 = scmp.ge.s32.totalorder %s25, 4
      %s27 = scalar_select %p26, 0, %s25
      %s28 = sadd.s32 1, %s19
      %s29 = scalar_select %p26, %s28, %s19
      %p30 = scmp.ge.s32.totalorder %s29, 1
      %s31 = scalar_select %p30, 0, %s29
      %s32 = ssub.s32 %s20, %s27
      %s33 = ssub.s32 %s19, %s31
      %s34 = sor.u32 %s32, %s33
      %p35 = scmp.eq.s32.totalorder %s34, 0
      %s37 = sadd.s32 %s36, 1
      %s38 = scalar_select %p35, %s36, %s37
      %p41 = pneg %p35
      %p42 = scmp.eq.s32.totalorder %s12, 3
      %p43 = por %p41, %p42
      %p44 = scmp.ne.s32.totalorder %s36, %s39
      %p45 = scmp.eq.s32.totalorder %s12, 0
      %p46 = por %p44, %p45
      %p47 = scmp.ne.s32.totalorder %s36, %s39
      %p48 = scmp.eq.s32.totalorder %s17, 3
      %p49 = por %p47, %p48
      %p50 = scmp.ne.s32.totalorder %s39, %s40
      %p51 = scmp.eq.s32.totalorder %s17, 0
      %p52 = por %p50, %p51
      %p53 = scmp.ne.s32.totalorder %s39, %s40
      %p54 = scmp.eq.s32.totalorder %s18, 3
      %p55 = por %p53, %p54
      %p57 = scmp.ne.s32.totalorder %s40, %s56
      %p58 = scmp.eq.s32.totalorder %s18, 0
      %p59 = por %p57, %p58
      %s61 = sadd.s32 %s60, 1
      %p64 = scmp.eq.s32.totalorder %s12, 3
      %p65 = scmp.ne.s32.totalorder %s60, %s62
      %p66 = scmp.eq.s32.totalorder %s12, 0
      %p67 = por %p65, %p66
      %p68 = scmp.ne.s32.totalorder %s60, %s62
      %p69 = scmp.eq.s32.totalorder %s17, 3
      %p70 = por %p68, %p69
      %p71 = scmp.ne.s32.totalorder %s62, %s63
      %p72 = scmp.eq.s32.totalorder %s17, 0
      %p73 = por %p71, %p72
      %p74 = scmp.ne.s32.totalorder %s62, %s63
      %p75 = scmp.eq.s32.totalorder %s18, 3
      %p76 = por %p74, %p75
      %p78 = scmp.ne.s32.totalorder %s63, %s77
      %p79 = scmp.eq.s32.totalorder %s18, 0
      %p80 = por %p78, %p79
      %s82 = sadd.s32 %s81, 1
      %p85 = scmp.eq.s32.totalorder %s12, 3
      %p86 = scmp.ne.s32.totalorder %s81, %s83
      %p87 = scmp.eq.s32.totalorder %s12, 0
      %p88 = por %p86, %p87
      %p89 = scmp.ne.s32.totalorder %s81, %s83
      %p90 = scmp.eq.s32.totalorder %s17, 3
      %p91 = por %p89, %p90
      %p92 = scmp.ne.s32.totalorder %s83, %s84
      %p93 = scmp.eq.s32.totalorder %s17, 0
      %p94 = por %p92, %p93
      %p95 = scmp.ne.s32.totalorder %s83, %s84
      %p96 = scmp.eq.s32.totalorder %s18, 3
      %p97 = por %p95, %p96
      %p99 = scmp.ne.s32.totalorder %s84, %s98
      %p100 = scmp.eq.s32.totalorder %s18, 0
      %p101 = por %p99, %p100
      %s103 = sadd.s32 %s102, 1
      %p106 = scmp.eq.s32.totalorder %s12, 3
      %p107 = scmp.ne.s32.totalorder %s102, %s104
      %p108 = scmp.eq.s32.totalorder %s12, 0
      %p109 = por %p107, %p108
      %p110 = scmp.ne.s32.totalorder %s102, %s104
      %p111 = scmp.eq.s32.totalorder %s17, 3
      %p112 = por %p110, %p111
      %p113 = scmp.ne.s32.totalorder %s104, %s105
      %p114 = scmp.eq.s32.totalorder %s17, 0
      %p115 = por %p113, %p114
      %p116 = scmp.ne.s32.totalorder %s104, %s105
      %p117 = scmp.eq.s32.totalorder %s18, 3
      %p118 = por %p116, %p117
      %p120 = scmp.ne.s32.totalorder %s105, %s119
      %p121 = scmp.eq.s32.totalorder %s18, 0
      %p122 = por %p120, %p121
      %s124 = sadd.s32 %s123, 1
      %p127 = scmp.eq.s32.totalorder %s12, 3
      %p128 = scmp.ne.s32.totalorder %s123, %s125
      %p129 = scmp.eq.s32.totalorder %s12, 0
      %p130 = por %p128, %p129
      %p131 = scmp.ne.s32.totalorder %s123, %s125
      %p132 = scmp.eq.s32.totalorder %s17, 3
      %p133 = por %p131, %p132
      %p134 = scmp.ne.s32.totalorder %s125, %s126
      %p135 = scmp.eq.s32.totalorder %s17, 0
      %p136 = por %p134, %p135
      %p137 = scmp.ne.s32.totalorder %s125, %s126
      %p138 = scmp.eq.s32.totalorder %s18, 3
      %p139 = por %p137, %p138
      %p141 = scmp.ne.s32.totalorder %s126, %s140
      %p142 = scmp.eq.s32.totalorder %s18, 0
      %p143 = por %p141, %p142
      %s144 = ssub.s32 %s19, %s31
      %p145 = scmp.eq.s32.totalorder %s144, 0
      %s147 = sadd.s32 %s146, 1
      %s148 = scalar_select %p145, %s146, %s147
      %p151 = pneg %p145
      %p152 = scmp.eq.s32.totalorder %s12, 3
      %p153 = por %p151, %p152
      %p154 = scmp.ne.s32.totalorder %s146, %s149
      %p155 = scmp.eq.s32.totalorder %s12, 0
      %p156 = por %p154, %p155
      %p157 = scmp.ne.s32.totalorder %s146, %s149
      %p158 = scmp.eq.s32.totalorder %s17, 3
      %p159 = por %p157, %p158
      %p160 = scmp.ne.s32.totalorder %s149, %s150
      %p161 = scmp.eq.s32.totalorder %s17, 0
      %p162 = por %p160, %p161
      %p163 = scmp.ne.s32.totalorder %s149, %s150
      %p164 = scmp.eq.s32.totalorder %s18, 3
      %p165 = por %p163, %p164
      %p167 = scmp.ne.s32.totalorder %s150, %s166
      %p168 = scmp.eq.s32.totalorder %s18, 0
      %p169 = por %p167, %p168
      %p170 = scmp.le.s32.totalorder 1, %s12
      %p171 = scmp.lt.s32.totalorder %s12, 5
      %p172 = pnand %p170, %p171
      %p173 = pneg %p172
      // Predicated region
      $region9: #{intersection_forward.1} parent=5 // pred_check
        _
      $region10: #{intersection_forward.1} parent=5 // pred_check_branch
        %175 = sbr.rel (%p172) target = $region12
      $region11: #{intersection_forward.1} parent=5 // pred_region
        %s176 = ssub.s32 %s12, 1
        // Predicated region
        $region13: #{intersection_forward.1} parent=11 // pred_check
          %p177 = pneg %p73
        $region14: #{intersection_forward.1} parent=11 // pred_check_branch
          %179 = sbr.rel (%p177) target = $region16
        $region15: #{intersection_forward.1} parent=11 // pred_region
          _
        $region16: #{intersection_forward.1} parent=11 // pred_fallthru
          _
        // Predicated region
        $region17: #{intersection_forward.1} parent=11 // pred_check
          %p180 = pneg %p94
        $region18: #{intersection_forward.1} parent=11 // pred_check_branch
          %182 = sbr.rel (%p180) target = $region20
        $region19: #{intersection_forward.1} parent=11 // pred_region
          _
        $region20: #{intersection_forward.1} parent=11 // pred_fallthru
          _
        // Predicated region
        $region21: #{intersection_forward.1} parent=11 // pred_check
          %p183 = pneg %p115
        $region22: #{intersection_forward.1} parent=11 // pred_check_branch
          %185 = sbr.rel (%p183) target = $region24
        $region23: #{intersection_forward.1} parent=11 // pred_region
          _
        $region24: #{intersection_forward.1} parent=11 // pred_fallthru
          _
        // Predicated region
        $region25: #{intersection_forward.1} parent=11 // pred_check
          %p186 = pneg %p136
        $region26: #{intersection_forward.1} parent=11 // pred_check_branch
          %188 = sbr.rel (%p186) target = $region28
        $region27: #{intersection_forward.1} parent=11 // pred_region
          _
        $region28: #{intersection_forward.1} parent=11 // pred_fallthru
          _
      $region12: #{intersection_forward.1} parent=5 // pred_fallthru
        _
      %p189 = scmp.lt.s32.totalorder %s12, 4
      // Predicated region
      $region29: #{intersection_forward.1} parent=5 // pred_check
        %p190 = pneg %p189
      $region30: #{intersection_forward.1} parent=5 // pred_check_branch
        %192 = sbr.rel (%p190) target = $region32
      $region31: #{intersection_forward.1} parent=5 // pred_region
        // Predicated region
        $region33: #{intersection_forward.1} parent=31 // pred_check
          %p193 = pneg %p46
        $region34: #{intersection_forward.1} parent=31 // pred_check_branch
          %195 = sbr.rel (%p193) target = $region36
        $region35: #{intersection_forward.1} parent=31 // pred_region
          %s196 = smul.u32 3, %s19
          %p197 = scmp.lt.s32.totalorder %s20, 3
          %s198 = scalar_select %p197, %s20, 3
          %p199 = scmp.lt.s32.totalorder %s196, 2
          %s200 = scalar_select %p199, %s196, 2
          %s201 = smul.addr %s198, 3
          %s202 = sadd.s32 %s200, %s201
          %s203 = smul.addr %s202, 8
          %s204 = scalar_lea.vmem %s0, %s203
          %s205 = smul.u32 3, %s19
        $region36: #{intersection_forward.1} parent=31 // pred_fallthru
          _
      $region32: #{intersection_forward.1} parent=5 // pred_fallthru
        _
      %p206 = scmp.le.s32.totalorder 1, %s12
      %p207 = scmp.lt.s32.totalorder %s12, 5
      %p208 = pnand %p206, %p207
      %p209 = pneg %p208
      // Predicated region
      $region37: #{intersection_forward.1} parent=5 // pred_check
        _
      $region38: #{intersection_forward.1} parent=5 // pred_check_branch
        %211 = sbr.rel (%p208) target = $region40
      $region39: #{intersection_forward.1} parent=5 // pred_region
        %s212 = ssub.s32 %s12, 1
        %s213 = smul.u32 3, %s21
        %p214 = scmp.lt.s32.totalorder %s22, 3
        %s215 = scalar_select %p214, %s22, 3
        %p216 = scmp.lt.s32.totalorder %s213, 2
        %s217 = scalar_select %p216, %s213, 2
        %s218 = smul.addr %s215, 3
        %s219 = sadd.s32 %s217, %s218
        %s220 = smul.addr %s219, 8
        %s221 = scalar_lea.vmem %s0, %s220
        %p222 = pneg %p52
        %p223 = pneg %p49
        %p224 = pneg %p73
        %p225 = pneg %p70
        %p226 = pneg %p94
        %p227 = pneg %p91
        %p228 = pneg %p115
        %p229 = pneg %p112
        %p230 = pneg %p136
        %p231 = pneg %p133
        %p232 = pneg %p162
        %p233 = pneg %p159
        %s234 = smul.u32 3, %s21
        %p235 = scmp.lt.s32.totalorder %s22, 3
        %s236 = scalar_select %p235, %s22, 3
        %p237 = scmp.lt.s32.totalorder %s234, 2
        %s238 = scalar_select %p237, %s234, 2
        %s239 = smul.addr %s236, 3
        %s240 = sadd.s32 %s238, %s239
        %s241 = smul.addr %s240, 8
        %s242 = scalar_lea.vmem %s0, %s241
        %s243 = smul.u32 3, %s21
        %s244 = smul.u32 3, %s21
        %p246 = scmp.eq.s32.totalorder %s22, 0
        // Predicated region
        $region41: #{intersection_forward.1} parent=39 // pred_check
          %p247 = pneg %p246
        $region42: #{intersection_forward.1} parent=39 // pred_check_branch
          %249 = sbr.rel (%p247) target = $region44
        $region43: #{intersection_forward.1} parent=39 // pred_region
          %vm250 = vcmask 261120
          %251 = vst.msk [vmem:[#allocation2] sm:$0xff] %vm250, -inf
          %252 = vst.msk [vmem:[#allocation2 + $0x8] sm:$0xff] %vm250, -inf
          %vm253 = vcmask 254976
          %254 = vst.msk [vmem:[#allocation2 + $0x10] sm:$0x3] %vm253, -inf
          %255 = vst.msk [vmem:[#allocation3] sm:$0xff] %vm250, 0.0
          %256 = vst.msk [vmem:[#allocation3 + $0x8] sm:$0xff] %vm250, 0.0
          %257 = vst.msk [vmem:[#allocation3 + $0x10] sm:$0x3] %vm253, 0.0
          %258 = vst.msk [vmem:[#allocation4] sm:$0xff] %vm250, 0.0
          %259 = vst.msk [vmem:[#allocation4 + $0x8] sm:$0xff] %vm250, 0.0
          %260 = vst.msk [vmem:[#allocation4 + $0x10] sm:$0x3] %vm253, 0.0
        $region44: #{intersection_forward.1} parent=39 // pred_fallthru
          _
        %v261 = vld [vmem:[%s242] sm:$0xff]
        %v262 = vld [vmem:[%s242 + $0x8] sm:$0xff]
        %v263 = vld [vmem:[%s242 + $0x10] sm:$0x3]
        %v264 = vpack.c.bf16 %v262, %v261
        %v265 = vpack.c.bf16 %v263, %v263
        %v266 = vld [vmem:[%s1] sm:$0xf]
        %v267 = vld [vmem:[%s1 + $0x4] sm:$0xf]
        %v268 = vld [vmem:[%s1 + $0x8] sm:$0xf]
        %v269 = vld [vmem:[%s1 + $0xc] sm:$0xf]
        %v270 = vld [vmem:[%s2] sm:$0x1]
        %v272 = vlaneseq
        %v273 = vshrl.u32 %v272, 7
        %v274 = vsub.s32 0, %v273
        %v275 = vrot.slane %v270, %v274
        %v281 = vunpack.c.l.b16 %v266
        %v282 = vunpack.c.l.b16 %v267
        %v283 = vunpack.c.l.b16 %v268
        %v284 = vunpack.c.l.b16 %v269
        %v285 = vpack.c.b16 %v282, %v281
        %v286 = vpack.c.b16 %v284, %v283
        %vm289 = vcmask 261120
        %v291 = vsel %vm289, %v264, 0
        %v294 = vsel %vm289, %v265, 0
        %296 = vmatprep.subr.bf16.mxu0 0
        %297 = vmatpush1.bf16.msra.mxu0 %v285
        %298 = vmatprep.subr.bf16.mxu0 0
        %299 = vmatpush1.bf16.msra.mxu0 %v286
        %300 = vmatprep.subr.bf16.mxu0 0
        %301 = vmatpush1.bf16.msra.mxu0 0
        %302 = vmatprep.subr.bf16.mxu0 0
        %303 = vmatpush1.bf16.msra.mxu0 0
        %304 = vmatprep.subr.bf16.mxu0 0
        %305 = vmatpush1.bf16.msra.mxu0 0
        %306 = vmatprep.subr.bf16.mxu0 0
        %307 = vmatpush1.bf16.msra.mxu0 0
        %308 = vmatprep.subr.bf16.mxu0 0
        %309 = vmatpush1.bf16.msra.mxu0 0
        %310 = vmatprep.subr.bf16.mxu0 0
        %311 = vmatpush1.bf16.msra.mxu0 0
        %312 = vmatprep.subr.bf16.mxu0 0
        %313 = vmatpush1.bf16.msra.mxu0 0
        %314 = vmatprep.subr.bf16.mxu0 0
        %315 = vmatpush1.bf16.msra.mxu0 0
        %316 = vmatprep.subr.bf16.mxu0 0
        %317 = vmatpush1.bf16.msra.mxu0 0
        %318 = vmatprep.subr.bf16.mxu0 0
        %319 = vmatpush1.bf16.msra.mxu0 0
        %320 = vmatprep.subr.bf16.mxu0 0
        %321 = vmatpush1.bf16.msra.mxu0 0
        %322 = vmatprep.subr.bf16.mxu0 0
        %323 = vmatpush1.bf16.msra.mxu0 0
        %324 = vmatprep.subr.bf16.mxu0 0
        %325 = vmatpush1.bf16.msra.mxu0 0
        %326 = vmatprep.subr.bf16.mxu0 0
        %327 = vmatpush1.bf16.msra.mxu0 0
        %328 = vmatprep.mubr.bf16.mxu0 0
        %329 = vmatmul.mubr.bf16.gmra.mrb[0].mxu0 %v291
        %v330 = vpop.f32.mrb[0].mxu0
        %v331 = vadd.f32 %v275, %v330
        %v332 = vpop.f32.mrb[0].mxu0
        %v333 = vpop.f32.mrb[0].mxu0
        %v334 = vadd.f32 %v275, %v333
        %v335 = vpop.f32.mrb[0].mxu0
        %336 = vmatprep.mubr.bf16.mxu0 0
        %337 = vmatmul.mubr.bf16.gmra.mrb[0].mxu0 %v294
        %v338 = vpop.f32.mrb[0].mxu0
        %v339 = vadd.f32 %v275, %v338
        %v340 = vpop.f32.mrb[0].mxu0
        %v341 = vpop.f32.mrb[0].mxu0
        %v342 = vpop.f32.mrb[0].mxu0
        %343 = vdwg.mxu0
        %v344 = vmax.f32 %v331, 0.0
        %v345 = vmax.f32 %v334, 0.0
        %v346 = vmax.f32 %v339, 0.0
        %v347 = vpack.c.bf16 %v345, %v344
        %v348 = vpack.c.bf16 %v346, %v346
        %v349 = vld [vmem:[%s3] sm:$0xf]
        %v350 = vld [vmem:[%s3 + $0x4] sm:$0xf]
        %v351 = vld [vmem:[%s3 + $0x8] sm:$0xf]
        %v352 = vld [vmem:[%s3 + $0xc] sm:$0xf]
        %v353 = vld [vmem:[%s4] sm:$0x1]
        %v355 = vlaneseq
        %v356 = vshrl.u32 %v355, 7
        %v357 = vsub.s32 0, %v356
        %v358 = vrot.slane %v353, %v357
        %v364 = vunpack.c.l.b16 %v349
        %v365 = vunpack.c.l.b16 %v350
        %v366 = vunpack.c.l.b16 %v351
        %v367 = vunpack.c.l.b16 %v352
        %v368 = vpack.c.b16 %v365, %v364
        %v369 = vpack.c.b16 %v367, %v366
        %v373 = vsel %vm289, %v347, 0
        %v376 = vsel %vm289, %v348, 0
        %378 = vmatprep.subr.bf16.mxu0 0
        %379 = vmatpush1.bf16.msra.mxu0 %v368
        %380 = vmatprep.subr.bf16.mxu0 0
        %381 = vmatpush1.bf16.msra.mxu0 %v369
        %382 = vmatprep.subr.bf16.mxu0 0
        %383 = vmatpush1.bf16.msra.mxu0 0
        %384 = vmatprep.subr.bf16.mxu0 0
        %385 = vmatpush1.bf16.msra.mxu0 0
        %386 = vmatprep.subr.bf16.mxu0 0
        %387 = vmatpush1.bf16.msra.mxu0 0
        %388 = vmatprep.subr.bf16.mxu0 0
        %389 = vmatpush1.bf16.msra.mxu0 0
        %390 = vmatprep.subr.bf16.mxu0 0
        %391 = vmatpush1.bf16.msra.mxu0 0
        %392 = vmatprep.subr.bf16.mxu0 0
        %393 = vmatpush1.bf16.msra.mxu0 0
        %394 = vmatprep.subr.bf16.mxu0 0
        %395 = vmatpush1.bf16.msra.mxu0 0
        %396 = vmatprep.subr.bf16.mxu0 0
        %397 = vmatpush1.bf16.msra.mxu0 0
        %398 = vmatprep.subr.bf16.mxu0 0
        %399 = vmatpush1.bf16.msra.mxu0 0
        %400 = vmatprep.subr.bf16.mxu0 0
        %401 = vmatpush1.bf16.msra.mxu0 0
        %402 = vmatprep.subr.bf16.mxu0 0
        %403 = vmatpush1.bf16.msra.mxu0 0
        %404 = vmatprep.subr.bf16.mxu0 0
        %405 = vmatpush1.bf16.msra.mxu0 0
        %406 = vmatprep.subr.bf16.mxu0 0
        %407 = vmatpush1.bf16.msra.mxu0 0
        %408 = vmatprep.subr.bf16.mxu0 0
        %409 = vmatpush1.bf16.msra.mxu0 0
        %410 = vmatprep.mubr.bf16.mxu0 0
        %411 = vmatmul.mubr.bf16.gmra.mrb[0].mxu0 %v373
        %v412 = vpop.f32.mrb[0].mxu0
        %v413 = vadd.f32 %v358, %v412
        %v414 = vpop.f32.mrb[0].mxu0
        %v415 = vpop.f32.mrb[0].mxu0
        %v416 = vadd.f32 %v358, %v415
        %v417 = vpop.f32.mrb[0].mxu0
        %418 = vmatprep.mubr.bf16.mxu0 0
        %419 = vmatmul.mubr.bf16.gmra.mrb[0].mxu0 %v376
        %v420 = vpop.f32.mrb[0].mxu0
        %v421 = vadd.f32 %v358, %v420
        %v422 = vpop.f32.mrb[0].mxu0
        %v423 = vpop.f32.mrb[0].mxu0
        %v424 = vpop.f32.mrb[0].mxu0
        %425 = vdwg.mxu0
        %v426 = vld [vmem:[#allocation2] sm:$0xff]
        %v427 = vld [vmem:[#allocation2 + $0x8] sm:$0xff]
        %v428 = vld [vmem:[#allocation2 + $0x10] sm:$0x3]
        %v429 = vmax.f32 %v426, %v413
        %v430 = vmax.f32 %v427, %v416
        %v431 = vmax.f32 %v428, %v421
        %v432 = vsub.f32 %v426, %v429
        %v433 = vsub.f32 %v427, %v430
        %v434 = vsub.f32 %v428, %v431
        %v435 = vmul.f32 %v432, 1.442695
        %v436 = vpow.pop %v435
        %v437 = vmul.f32 %v433, 1.442695
        %v438 = vpow.pop %v437
        %v439 = vmul.f32 %v434, 1.442695
        %v440 = vpow.pop %v439
        %v441 = vsub.f32 %v413, %v429
        %v442 = vsub.f32 %v416, %v430
        %v443 = vsub.f32 %v421, %v431
        %v444 = vmul.f32 %v441, 1.442695
        %v445 = vpow.pop %v444
        %v446 = vmul.f32 %v442, 1.442695
        %v447 = vpow.pop %v446
        %v448 = vmul.f32 %v443, 1.442695
        %v449 = vpow.pop %v448
        %v450 = vld [vmem:[#allocation3] sm:$0xff]
        %v451 = vld [vmem:[#allocation3 + $0x8] sm:$0xff]
        %v452 = vld [vmem:[#allocation3 + $0x10] sm:$0x3]
        %v453 = vmul.f32 %v436, %v450
        %v454 = vmul.f32 %v438, %v451
        %v455 = vmul.f32 %v440, %v452
        %v456 = vadd.f32 %v453, %v445
        %v457 = vadd.f32 %v454, %v447
        %v458 = vadd.f32 %v455, %v449
        %459 = vst.msk [vmem:[#allocation3] sm:$0xff] %vm289, %v456
        %460 = vst.msk [vmem:[#allocation3 + $0x8] sm:$0xff] %vm289, %v457
        %vm461 = vcmask 254976
        %462 = vst.msk [vmem:[#allocation3 + $0x10] sm:$0x3] %vm461, %v458
        %v463 = vld [vmem:[#allocation4] sm:$0xff]
        %v464 = vld [vmem:[#allocation4 + $0x8] sm:$0xff]
        %v465 = vld [vmem:[#allocation4 + $0x10] sm:$0x3]
        %v466 = vmul.f32 %v436, %v463
        %v467 = vmul.f32 %v438, %v464
        %v468 = vmul.f32 %v440, %v465
        %v469 = vmul.f32 %v445, %v261
        %v470 = vmul.f32 %v447, %v262
        %v471 = vmul.f32 %v449, %v263
        %v472 = vadd.f32 %v466, %v469
        %v473 = vadd.f32 %v467, %v470
        %v474 = vadd.f32 %v468, %v471
        %475 = vst.msk [vmem:[#allocation4] sm:$0xff] %vm289, %v472
        %476 = vst.msk [vmem:[#allocation4 + $0x8] sm:$0xff] %vm289, %v473
        %477 = vst.msk [vmem:[#allocation4 + $0x10] sm:$0x3] %vm461, %v474
        %478 = vst.msk [vmem:[#allocation2] sm:$0xff] %vm289, %v429
        %479 = vst.msk [vmem:[#allocation2 + $0x8] sm:$0xff] %vm289, %v430
        %480 = vst.msk [vmem:[#allocation2 + $0x10] sm:$0x3] %vm461, %v431
        %p481 = scmp.eq.s32.totalorder %s22, 3
        // Predicated region
        $region45: #{intersection_forward.1} parent=39 // pred_check
          %p482 = pneg %p481
        $region46: #{intersection_forward.1} parent=39 // pred_check_branch
          %484 = sbr.rel (%p482) target = $region48
        $region47: #{intersection_forward.1} parent=39 // pred_region
          %v485 = vld [vmem:[#allocation4] sm:$0xff]
          %v486 = vld [vmem:[#allocation4 + $0x8] sm:$0xff]
          %v487 = vld [vmem:[#allocation4 + $0x10] sm:$0x3]
          %v488 = vld [vmem:[#allocation3] sm:$0xff]
          %v489 = vld [vmem:[#allocation3 + $0x8] sm:$0xff]
          %v490 = vld [vmem:[#allocation3 + $0x10] sm:$0x3]
          %v491 = vrcp.pop %v488
          %v492 = vrcp.pop %v489
          %v493 = vrcp.pop %v490
          %v494 = vmul.f32 %v485, %v491
          %v495 = vmul.f32 %v486, %v492
          %v496 = vmul.f32 %v487, %v493
          %497 = vst.msk [vmem:[#allocation4] sm:$0xff] %vm289, %v494
          %498 = vst.msk [vmem:[#allocation4 + $0x8] sm:$0xff] %vm289, %v495
          %499 = vst.msk [vmem:[#allocation4 + $0x10] sm:$0x3] %vm461, %v496
        $region48: #{intersection_forward.1} parent=39 // pred_fallthru
          _
        // Predicated region
        $region49: #{intersection_forward.1} parent=39 // pred_check
          %p500 = pneg %p159
        $region50: #{intersection_forward.1} parent=39 // pred_check_branch
          %502 = sbr.rel (%p500) target = $region52
        $region51: #{intersection_forward.1} parent=39 // pred_region
          %s503 = smul.u32 3, %s21
          %s505 = ssub.s32 384, 384
          %506 = vsyncadd [#allocation5], %s505
          %s507 = smul.addr %s503, 128
          %s508 = scalar_lea.hbm %s5, %s507
          %s509 = sshll.u32 [#allocation4], 4
          %s510 = int_to_ptr.vmem [resolvable:$true] %s509
          %515 = dma.vmem_to_hbm [thread:$0]  %s510, 384, %s508, [#allocation5], 128, 128, 8
        $region52: #{intersection_forward.1} parent=39 // pred_fallthru
          _
        // Predicated region
        $region53: #{intersection_forward.1} parent=39 // pred_check
          %p516 = pneg %p159
        $region54: #{intersection_forward.1} parent=39 // pred_check_branch
          %518 = sbr.rel (%p516) target = $region56
        $region55: #{intersection_forward.1} parent=39 // pred_region
          %519 = dma.done [#allocation5], 384
        $region56: #{intersection_forward.1} parent=39 // pred_fallthru
          _
      $region40: #{intersection_forward.1} parent=5 // pred_fallthru
        _
      %p520 = scmp.le.s32.totalorder 2, %s12
      // Predicated region
      $region57: #{intersection_forward.1} parent=5 // pred_check
        %p521 = pneg %p520
      $region58: #{intersection_forward.1} parent=5 // pred_check_branch
        %523 = sbr.rel (%p521) target = $region60
      $region59: #{intersection_forward.1} parent=5 // pred_region
        %s524 = ssub.s32 %s12, 2
      $region60: #{intersection_forward.1} parent=5 // pred_fallthru
        _
    $region6: #{intersection_forward.1} parent=1 // loop_footer
      %s16 = sadd.s32 1, %s12
    $region7: #{intersection_forward.1} parent=1 // loop_footer_branch
      %11 = sbr.rel target = $region3
    $region8: #{intersection_forward.1} parent=1 // loop_exit
      _
    %525 = vsyncpa [#allocation5], 1
    %s526 = scalar_lea.sflag [#allocation5], 1
    %527 = vsyncpa %s526, 1

</llo_original>
